<compile_context>
chip_gen: v7x
topology: tpu7x:2x2x1
jax: 0.10.0
libtpu: 0.0.40
codegen_flags: <defaults>
</compile_context>

<pallas_src>
import functools

import numpy as np
import jax
import jax.numpy as jnp
from jax.experimental import pallas as pl
from jax.experimental.pallas import tpu as pltpu


ROI_SAMPLER_CFG = dict(
    ROI_PER_IMAGE=64,
    FG_RATIO=0.5,
    REG_FG_THRESH=0.55,
    CLS_FG_THRESH=0.75,
    CLS_BG_THRESH=0.25,
    CLS_BG_THRESH_LO=0.1,
    HARD_BG_RATIO=0.8,
    CLS_SCORE_TYPE='roi_iou',
    SAMPLE_ROI_BY_EACH_CLASS=True,
)


# ---------------------------------------------------------------------------
# Kernel: per-class max-IoU3D + gt assignment + reg/cls labels (fused)
#   rois_t_ref : (1, 8, R)  rows = x,y,z,dx,dy,dz,heading,roi_label  (R on lanes)
#   gt_ref     : (1, G, 8)  cols = x,y,z,dx,dy,dz,heading,gt_label
#   outputs    : (1, 1, R)  lane-dense rows
# ---------------------------------------------------------------------------
def _iou_assign_kernel(rois_t_ref, gt_ref, max_ref, arg_ref, reg_ref, cls_ref,
                       *, reg_fg, fg_th, bg_th):
    rt = rois_t_ref[0]                       # (8, R)  f32
    gt = gt_ref[0]                           # (G, 8)  f32
    R = rt.shape[1]
    G = gt.shape[0]

    rx, ry, rz = rt[0:1, :], rt[1:2, :], rt[2:3, :]          # (1, R)
    rdx, rdy, rdz = rt[3:4, :], rt[4:5, :], rt[5:6, :]
    rlab = rt[7:8, :].astype(jnp.int32)                      # (1, R)

    gx, gy, gz = gt[:, 0:1], gt[:, 1:2], gt[:, 2:3]          # (G, 1)
    gdx, gdy, gdz = gt[:, 3:4], gt[:, 4:5], gt[:, 5:6]
    glab = gt[:, 7:8].astype(jnp.int32)                      # (G, 1)

    # TODO(synk): exact rotated-BEV overlap (iou3d_nms CUDA polygon clipping) has no
    # clean Pallas equivalent; axis-aligned overlap is used (exact when heading==0).
    ox = jnp.maximum(
        jnp.minimum(rx + 0.5 * rdx, gx + 0.5 * gdx)
        - jnp.maximum(rx - 0.5 * rdx, gx - 0.5 * gdx), 0.0)          # (G, R)
    oy = jnp.maximum(
        jnp.minimum(ry + 0.5 * rdy, gy + 0.5 * gdy)
        - jnp.maximum(ry - 0.5 * rdy, gy - 0.5 * gdy), 0.0)
    oz = jnp.maximum(
        jnp.minimum(rz + 0.5 * rdz, gz + 0.5 * gdz)
        - jnp.maximum(rz - 0.5 * rdz, gz - 0.5 * gdz), 0.0)

    inter = ox * oy * oz                                             # (G, R)
    vol_r = rdx * rdy * rdz                                          # (1, R)
    vol_g = gdx * gdy * gdz                                          # (G, 1)
    iou = inter / jnp.maximum(vol_r + vol_g - inter, 1e-6)           # (G, R)

    same_cls = glab == rlab                                          # (G, R)
    gt_valid = vol_g > 0.0                                           # (G, 1) padded gts have zero size
    masked = jnp.where(jnp.logical_and(same_cls, gt_valid), iou, -1.0)

    max_v = jnp.max(masked, axis=0, keepdims=True)                   # (1, R)
    row = jax.lax.broadcasted_iota(jnp.int32, (G, R), 0)
    arg = jnp.min(jnp.where(masked == max_v, row, G), axis=0, keepdims=True)  # first argmax, (1, R)

    max_pos = jnp.maximum(max_v, 0.0)            # rois with no valid same-class gt -> iou 0, gt 0
    max_ref[0] = max_pos
    arg_ref[0] = arg

    # reg_valid_mask / rcnn_cls_labels ('roi_iou') are elementwise in the iou:
    # computing them per-roi here and gathering after sampling is exact.
    reg_ref[0] = (max_pos > reg_fg).astype(jnp.int32)
    fg = max_pos > fg_th
    bg = max_pos < bg_th
    interval = jnp.logical_and(jnp.logical_not(fg), jnp.logical_not(bg))
    cls = fg.astype(jnp.float32)
    cls_ref[0] = jnp.where(interval, (max_pos - bg_th) / (fg_th - bg_th), cls)


def compute_iou_assign_labels(rois, roi_labels, gt_boxes, cfg):
    """Returns (max_iou, gt_assignment, reg_valid, cls_labels), each (B, R)."""
    B, R, _ = rois.shape
    G = gt_boxes.shape[1]
    # attributes on sublanes, rois on lanes (lane-dense inputs)
    rois_aug = jnp.concatenate(
        [rois[..., :7].astype(jnp.float32),
         roi_labels[..., None].astype(jnp.float32)], axis=-1)        # (B, R, 8)
    rois_t = jnp.transpose(rois_aug, (0, 2, 1))                      # (B, 8, R)
    gt = gt_boxes.astype(jnp.float32)                                # (B, G, 8)

    kernel = functools.partial(
        _iou_assign_kernel,
        reg_fg=float(cfg['REG_FG_THRESH']),
        fg_th=float(cfg['CLS_FG_THRESH']),
        bg_th=float(cfg['CLS_BG_THRESH']))

    out_row = pl.BlockSpec((1, 1, R), lambda b: (b, 0, 0))
    outs = pl.pallas_call(
        kernel,
        out_shape=(jax.ShapeDtypeStruct((B, 1, R), jnp.float32),
                   jax.ShapeDtypeStruct((B, 1, R), jnp.int32),
                   jax.ShapeDtypeStruct((B, 1, R), jnp.int32),
                   jax.ShapeDtypeStruct((B, 1, R), jnp.float32)),
        grid=(B,),
        in_specs=[pl.BlockSpec((1, 8, R), lambda b: (b, 0, 0)),
                  pl.BlockSpec((1, G, 8), lambda b: (b, 0, 0))],
        out_specs=(out_row, out_row, out_row, out_row),
        compiler_params=pltpu.CompilerParams(
            dimension_semantics=("parallel",)),   # v7x: 2 TCs split the batch
    )(rois_t, gt)
    max_iou, gt_assign, reg_valid, cls_labels = (o[:, 0, :] for o in outs)
    return max_iou, gt_assign, reg_valid, cls_labels


# ---------------------------------------------------------------------------
# fg/bg subsampling (static-shape reimplementation of subsample_rois), vmapped
# ---------------------------------------------------------------------------
def _subsample_rois_jax(max_overlaps, key, cfg):
    # TODO(synk): original uses np.random / torch.randint with dynamic shapes
    # (nonzero counts); the same sampling policy is reimplemented with
    # jax.random at static shapes (random stream differs).
    N = max_overlaps.shape[0]
    roi_per_image = int(cfg['ROI_PER_IMAGE'])
    fg_per_image = int(np.round(cfg['FG_RATIO'] * roi_per_image))
    fg_thresh = min(cfg['REG_FG_THRESH'], cfg['CLS_FG_THRESH'])

    fg_mask = max_overlaps >= fg_thresh
    easy_bg_mask = max_overlaps < cfg['CLS_BG_THRESH_LO']
    hard_bg_mask = jnp.logical_and(max_overlaps < cfg['REG_FG_THRESH'],
                                   max_overlaps >= cfg['CLS_BG_THRESH_LO'])

    kf, khp, kep, kfr, khr, ker = jax.random.split(key, 6)

    def masked_perm(mask, k):
        score = jnp.where(mask, jax.random.uniform(k, (N,)), 2.0)
        return jnp.argsort(score)   # masked indices, randomly permuted, packed to the front

    fg_order = masked_perm(fg_mask, kf)
    hard_order = masked_perm(hard_bg_mask, khp)
    easy_order = masked_perm(easy_bg_mask, kep)

    fg_num = jnp.sum(fg_mask.astype(jnp.int32))
    hard_avail = jnp.sum(hard_bg_mask.astype(jnp.int32))
    easy_avail = jnp.sum(easy_bg_mask.astype(jnp.int32))
    bg_num = hard_avail + easy_avail

    fg_this = jnp.minimum(fg_per_image, fg_num)
    fg_this = jnp.where(bg_num == 0, roi_per_image, fg_this)
    fg_this = jnp.where(fg_num == 0, 0, fg_this)
    bg_this = roi_per_image - fg_this

    hard_num = jnp.minimum(
        (bg_this.astype(jnp.float32) * cfg['HARD_BG_RATIO']).astype(jnp.int32), hard_avail)
    hard_num = jnp.where(easy_avail == 0, bg_this, hard_num)
    hard_num = jnp.where(hard_avail == 0, 0, hard_num)

    slots = jnp.arange(roi_per_image)
    rand_fg = jax.random.randint(kfr, (roi_per_image,), 0, jnp.maximum(fg_num, 1))
    rand_hard = jax.random.randint(khr, (roi_per_image,), 0, jnp.maximum(hard_avail, 1))
    rand_easy = jax.random.randint(ker, (roi_per_image,), 0, jnp.maximum(easy_avail, 1))

    fg_pick = jnp.where(slots < jnp.minimum(fg_this, fg_num), slots, rand_fg)
    fg_idx = fg_order[fg_pick]
    bg_slot = slots - fg_this
    bg_idx = jnp.where(bg_slot < hard_num, hard_order[rand_hard], easy_order[rand_easy])
    return jnp.where(slots < fg_this, fg_idx, bg_idx)


# ---------------------------------------------------------------------------
# Forward (ProposalTargetLayer.forward), fully batched + jitted
# ---------------------------------------------------------------------------
@functools.lru_cache(maxsize=None)
def _build_forward(cfg_items):
    cfg = dict(cfg_items)
    assert cfg['CLS_SCORE_TYPE'] == 'roi_iou', "only 'roi_iou' implemented"

    @jax.jit
    def fwd(rois, roi_scores, roi_labels, gt_boxes, key):
        B = rois.shape[0]
        max_iou, gt_assign, reg_valid_all, cls_all = compute_iou_assign_labels(
            rois, roi_labels, gt_boxes, cfg)

        keys = jax.random.split(key, B)
        sampled = jax.vmap(lambda mo, k: _subsample_rois_jax(mo, k, cfg))(max_iou, keys)  # (B, M)

        def gather2(x):
            return jnp.take_along_axis(x, sampled, axis=1)

        batch_rois = jnp.take_along_axis(rois, sampled[..., None], axis=1)
        gt_idx = gather2(gt_assign)
        batch_gt_of_rois = jnp.take_along_axis(gt_boxes, gt_idx[..., None], axis=1)

        return {
            'rois': batch_rois,
            'gt_of_rois': batch_gt_of_rois,
            'gt_iou_of_rois': gather2(max_iou),
            'roi_scores': gather2(roi_scores),
            'roi_labels': gather2(roi_labels),
            'reg_valid_mask': gather2(reg_valid_all),   # int32 (torch: int64)
            'rcnn_cls_labels': gather2(cls_all),        # float32
        }

    return fwd


def proposal_target_layer_forward(batch_dict, cfg, key):
    fwd = _build_forward(tuple(sorted(cfg.items())))
    return fwd(batch_dict['rois'].astype(jnp.float32),
               batch_dict['roi_scores'].astype(jnp.float32),
               batch_dict['roi_labels'].astype(jnp.int32),
               batch_dict['gt_boxes'].astype(jnp.float32),
               key)


# ---------------------------------------------------------------------------
if __name__ == "__main__":
    key = jax.random.PRNGKey(0)
    B, R, G = 2, 128, 16
    k1, k2, k3, k4, k5, ksamp = jax.random.split(key, 6)

    # Ground-truth boxes (heading = 0 so the axis-aligned IoU is exact); last 4 rows padded with zeros.
    centers = jax.random.uniform(k1, (B, G, 3), minval=-20.0, maxval=20.0)
    sizes = jax.random.uniform(k2, (B, G, 3), minval=2.0, maxval=5.0)
    heading = jnp.zeros((B, G, 1))
    gt_labels = jax.random.randint(k3, (B, G, 1), 1, 4).astype(jnp.float32)
    gt_boxes = jnp.concatenate([centers, sizes, heading, gt_labels], axis=-1)   # (B, G, 8)
    valid_gt = (jnp.arange(G) < G - 4)[None, :, None].astype(jnp.float32)
    gt_boxes = gt_boxes * valid_gt

    # ROIs: first half = jittered copies of valid gt boxes (foreground), rest = far-away boxes (background).
    kr1, kr2, kr3 = jax.random.split(k5, 3)
    gt_pick = jax.random.randint(k4, (B, R), 0, G - 4)
    base = jnp.take_along_axis(gt_boxes, gt_pick[..., None], axis=1)            # (B, R, 8)
    jitter = jax.random.uniform(kr1, (B, R, 7), minval=-0.2, maxval=0.2) \
        * jnp.array([1.0, 1.0, 1.0, 0.3, 0.3, 0.3, 0.0])
    rois_fg = base[..., :7] + jitter
    bg_centers = jax.random.uniform(kr2, (B, R, 3), minval=40.0, maxval=80.0)
    bg_sizes = jax.random.uniform(kr3, (B, R, 3), minval=2.0, maxval=5.0)
    rois_bg = jnp.concatenate([bg_centers, bg_sizes, jnp.zeros((B, R, 1))], axis=-1)
    is_fg = (jnp.arange(R) < R // 2)[None, :, None]
    rois = jnp.where(is_fg, rois_fg, rois_bg).astype(jnp.float32)
    roi_labels = jnp.where(jnp.arange(R)[None, :] < R // 2,
                           base[..., 7].astype(jnp.int32),
                           jax.random.randint(kr1, (B, R), 1, 4)).astype(jnp.int32)
    roi_scores = jax.random.uniform(kr2, (B, R)).astype(jnp.float32)

    batch_dict = dict(batch_size=B, rois=rois, roi_scores=roi_scores,
                      roi_labels=roi_labels, gt_boxes=gt_boxes)

    targets = proposal_target_layer_forward(batch_dict, ROI_SAMPLER_CFG, ksamp)
    targets = jax.block_until_ready(targets)

    M = ROI_SAMPLER_CFG['ROI_PER_IMAGE']
    assert targets['rois'].shape == (B, M, 7)
    assert targets['gt_of_rois'].shape == (B, M, 8)
    assert targets['gt_iou_of_rois'].shape == (B, M)
    assert targets['roi_scores'].shape == (B, M)
    assert targets['roi_labels'].shape == (B, M)
    assert targets['reg_valid_mask'].shape == (B, M)
    assert targets['rcnn_cls_labels'].shape == (B, M)
    # sanity: ious in [0,1], cls labels in [0,1]
    assert bool(jnp.all(targets['gt_iou_of_rois'] >= 0.0))
    assert bool(jnp.all(targets['gt_iou_of_rois'] <= 1.0 + 1e-5))
    assert bool(jnp.all(targets['rcnn_cls_labels'] >= 0.0))
    assert bool(jnp.all(targets['rcnn_cls_labels'] <= 1.0 + 1e-5))
    print("KERNEL_OK")
</pallas_src>

<mosaic_0001>
module attributes {stable_mosaic.version = 11 : i64} {
  func.func @_iou_assign_kernel(%arg0: i32, %arg1: memref<1x8x128xf32, #tpu.memory_space<vmem>>, %arg2: memref<1x16x8xf32, #tpu.memory_space<vmem>>, %arg3: memref<1x1x128xf32, #tpu.memory_space<vmem>>, %arg4: memref<1x1x128xi32, #tpu.memory_space<vmem>>, %arg5: memref<1x1x128xi32, #tpu.memory_space<vmem>>, %arg6: memref<1x1x128xf32, #tpu.memory_space<vmem>>) attributes {dimension_semantics = [#tpu.dimension_semantics<parallel>], iteration_bounds = array<i64: 2>, scalar_prefetch = 0 : i64, scratch_operands = 0 : i64, tpu.core_type = #tpu.core_type<tc>, window_params = [{transform_indices = @transform_0, window_bounds = array<i64: 1, 8, 128>}, {transform_indices = @transform_1, window_bounds = array<i64: 1, 16, 8>}, {transform_indices = @transform_2, window_bounds = array<i64: 1, 1, 128>}, {transform_indices = @transform_3, window_bounds = array<i64: 1, 1, 128>}, {transform_indices = @transform_4, window_bounds = array<i64: 1, 1, 128>}, {transform_indices = @transform_5, window_bounds = array<i64: 1, 1, 128>}]} {
    %c0 = arith.constant 0 : index
    %c0_0 = arith.constant 0 : index
    %c0_1 = arith.constant 0 : index
    %0 = vector.load %arg1[%c0, %c0_0, %c0_1] : memref<1x8x128xf32, #tpu.memory_space<vmem>>, vector<1x8x128xf32>
    %1 = vector.shape_cast %0 : vector<1x8x128xf32> to vector<8x128xf32>
    %c0_2 = arith.constant 0 : index
    %c0_3 = arith.constant 0 : index
    %c0_4 = arith.constant 0 : index
    %2 = vector.load %arg2[%c0_2, %c0_3, %c0_4] : memref<1x16x8xf32, #tpu.memory_space<vmem>>, vector<1x16x8xf32>
    %3 = vector.shape_cast %2 : vector<1x16x8xf32> to vector<16x8xf32>
    %4 = vector.extract_strided_slice %1 {offsets = [0, 0], sizes = [1, 128], strides = [1, 1]} : vector<8x128xf32> to vector<1x128xf32>
    %5 = vector.extract_strided_slice %1 {offsets = [1, 0], sizes = [1, 128], strides = [1, 1]} : vector<8x128xf32> to vector<1x128xf32>
    %6 = vector.extract_strided_slice %1 {offsets = [2, 0], sizes = [1, 128], strides = [1, 1]} : vector<8x128xf32> to vector<1x128xf32>
    %7 = vector.extract_strided_slice %1 {offsets = [3, 0], sizes = [1, 128], strides = [1, 1]} : vector<8x128xf32> to vector<1x128xf32>
    %8 = vector.extract_strided_slice %1 {offsets = [4, 0], sizes = [1, 128], strides = [1, 1]} : vector<8x128xf32> to vector<1x128xf32>
    %9 = vector.extract_strided_slice %1 {offsets = [5, 0], sizes = [1, 128], strides = [1, 1]} : vector<8x128xf32> to vector<1x128xf32>
    %10 = vector.extract_strided_slice %1 {offsets = [7, 0], sizes = [1, 128], strides = [1, 1]} : vector<8x128xf32> to vector<1x128xf32>
    %11 = arith.fptosi %10 : vector<1x128xf32> to vector<1x128xi32>
    %12 = vector.extract_strided_slice %3 {offsets = [0, 0], sizes = [16, 1], strides = [1, 1]} : vector<16x8xf32> to vector<16x1xf32>
    %13 = vector.extract_strided_slice %3 {offsets = [0, 1], sizes = [16, 1], strides = [1, 1]} : vector<16x8xf32> to vector<16x1xf32>
    %14 = vector.extract_strided_slice %3 {offsets = [0, 2], sizes = [16, 1], strides = [1, 1]} : vector<16x8xf32> to vector<16x1xf32>
    %15 = vector.extract_strided_slice %3 {offsets = [0, 3], sizes = [16, 1], strides = [1, 1]} : vector<16x8xf32> to vector<16x1xf32>
    %16 = vector.extract_strided_slice %3 {offsets = [0, 4], sizes = [16, 1], strides = [1, 1]} : vector<16x8xf32> to vector<16x1xf32>
    %17 = vector.extract_strided_slice %3 {offsets = [0, 5], sizes = [16, 1], strides = [1, 1]} : vector<16x8xf32> to vector<16x1xf32>
    %18 = vector.extract_strided_slice %3 {offsets = [0, 7], sizes = [16, 1], strides = [1, 1]} : vector<16x8xf32> to vector<16x1xf32>
    %19 = arith.fptosi %18 : vector<16x1xf32> to vector<16x1xi32>
    %cst = arith.constant 5.000000e-01 : f32
    %20 = vector.broadcast %cst : f32 to vector<1x128xf32>
    %21 = arith.mulf %20, %7 : vector<1x128xf32>
    %22 = arith.addf %4, %21 : vector<1x128xf32>
    %cst_5 = arith.constant 5.000000e-01 : f32
    %23 = vector.broadcast %cst_5 : f32 to vector<16x1xf32>
    %24 = arith.mulf %23, %15 : vector<16x1xf32>
    %25 = arith.addf %12, %24 : vector<16x1xf32>
    %26 = vector.broadcast %22 : vector<1x128xf32> to vector<16x128xf32>
    %27 = vector.broadcast %25 : vector<16x1xf32> to vector<16x128xf32>
    %28 = arith.minimumf %26, %27 : vector<16x128xf32>
    %cst_6 = arith.constant 5.000000e-01 : f32
    %29 = vector.broadcast %cst_6 : f32 to vector<1x128xf32>
    %30 = arith.mulf %29, %7 : vector<1x128xf32>
    %31 = arith.subf %4, %30 : vector<1x128xf32>
    %cst_7 = arith.constant 5.000000e-01 : f32
    %32 = vector.broadcast %cst_7 : f32 to vector<16x1xf32>
    %33 = arith.mulf %32, %15 : vector<16x1xf32>
    %34 = arith.subf %12, %33 : vector<16x1xf32>
    %35 = vector.broadcast %31 : vector<1x128xf32> to vector<16x128xf32>
    %36 = vector.broadcast %34 : vector<16x1xf32> to vector<16x128xf32>
    %37 = arith.maximumf %35, %36 : vector<16x128xf32>
    %38 = arith.subf %28, %37 : vector<16x128xf32>
    %cst_8 = arith.constant 0.000000e+00 : f32
    %39 = vector.broadcast %cst_8 : f32 to vector<16x128xf32>
    %40 = arith.maximumf %38, %39 : vector<16x128xf32>
    %cst_9 = arith.constant 5.000000e-01 : f32
    %41 = vector.broadcast %cst_9 : f32 to vector<1x128xf32>
    %42 = arith.mulf %41, %8 : vector<1x128xf32>
    %43 = arith.addf %5, %42 : vector<1x128xf32>
    %cst_10 = arith.constant 5.000000e-01 : f32
    %44 = vector.broadcast %cst_10 : f32 to vector<16x1xf32>
    %45 = arith.mulf %44, %16 : vector<16x1xf32>
    %46 = arith.addf %13, %45 : vector<16x1xf32>
    %47 = vector.broadcast %43 : vector<1x128xf32> to vector<16x128xf32>
    %48 = vector.broadcast %46 : vector<16x1xf32> to vector<16x128xf32>
    %49 = arith.minimumf %47, %48 : vector<16x128xf32>
    %cst_11 = arith.constant 5.000000e-01 : f32
    %50 = vector.broadcast %cst_11 : f32 to vector<1x128xf32>
    %51 = arith.mulf %50, %8 : vector<1x128xf32>
    %52 = arith.subf %5, %51 : vector<1x128xf32>
    %cst_12 = arith.constant 5.000000e-01 : f32
    %53 = vector.broadcast %cst_12 : f32 to vector<16x1xf32>
    %54 = arith.mulf %53, %16 : vector<16x1xf32>
    %55 = arith.subf %13, %54 : vector<16x1xf32>
    %56 = vector.broadcast %52 : vector<1x128xf32> to vector<16x128xf32>
    %57 = vector.broadcast %55 : vector<16x1xf32> to vector<16x128xf32>
    %58 = arith.maximumf %56, %57 : vector<16x128xf32>
    %59 = arith.subf %49, %58 : vector<16x128xf32>
    %cst_13 = arith.constant 0.000000e+00 : f32
    %60 = vector.broadcast %cst_13 : f32 to vector<16x128xf32>
    %61 = arith.maximumf %59, %60 : vector<16x128xf32>
    %cst_14 = arith.constant 5.000000e-01 : f32
    %62 = vector.broadcast %cst_14 : f32 to vector<1x128xf32>
    %63 = arith.mulf %62, %9 : vector<1x128xf32>
    %64 = arith.addf %6, %63 : vector<1x128xf32>
    %cst_15 = arith.constant 5.000000e-01 : f32
    %65 = vector.broadcast %cst_15 : f32 to vector<16x1xf32>
    %66 = arith.mulf %65, %17 : vector<16x1xf32>
    %67 = arith.addf %14, %66 : vector<16x1xf32>
    %68 = vector.broadcast %64 : vector<1x128xf32> to vector<16x128xf32>
    %69 = vector.broadcast %67 : vector<16x1xf32> to vector<16x128xf32>
    %70 = arith.minimumf %68, %69 : vector<16x128xf32>
    %cst_16 = arith.constant 5.000000e-01 : f32
    %71 = vector.broadcast %cst_16 : f32 to vector<1x128xf32>
    %72 = arith.mulf %71, %9 : vector<1x128xf32>
    %73 = arith.subf %6, %72 : vector<1x128xf32>
    %cst_17 = arith.constant 5.000000e-01 : f32
    %74 = vector.broadcast %cst_17 : f32 to vector<16x1xf32>
    %75 = arith.mulf %74, %17 : vector<16x1xf32>
    %76 = arith.subf %14, %75 : vector<16x1xf32>
    %77 = vector.broadcast %73 : vector<1x128xf32> to vector<16x128xf32>
    %78 = vector.broadcast %76 : vector<16x1xf32> to vector<16x128xf32>
    %79 = arith.maximumf %77, %78 : vector<16x128xf32>
    %80 = arith.subf %70, %79 : vector<16x128xf32>
    %cst_18 = arith.constant 0.000000e+00 : f32
    %81 = vector.broadcast %cst_18 : f32 to vector<16x128xf32>
    %82 = arith.maximumf %80, %81 : vector<16x128xf32>
    %83 = arith.mulf %40, %61 : vector<16x128xf32>
    %84 = arith.mulf %83, %82 : vector<16x128xf32>
    %85 = arith.mulf %7, %8 : vector<1x128xf32>
    %86 = arith.mulf %85, %9 : vector<1x128xf32>
    %87 = arith.mulf %15, %16 : vector<16x1xf32>
    %88 = arith.mulf %87, %17 : vector<16x1xf32>
    %89 = vector.broadcast %86 : vector<1x128xf32> to vector<16x128xf32>
    %90 = vector.broadcast %88 : vector<16x1xf32> to vector<16x128xf32>
    %91 = arith.addf %89, %90 : vector<16x128xf32>
    %92 = arith.subf %91, %84 : vector<16x128xf32>
    %cst_19 = arith.constant 9.99999997E-7 : f32
    %93 = vector.broadcast %cst_19 : f32 to vector<16x128xf32>
    %94 = arith.maximumf %92, %93 : vector<16x128xf32>
    %95 = arith.divf %84, %94 : vector<16x128xf32>
    %96 = vector.broadcast %19 : vector<16x1xi32> to vector<16x128xi32>
    %97 = vector.broadcast %11 : vector<1x128xi32> to vector<16x128xi32>
    %98 = arith.cmpi eq, %96, %97 : vector<16x128xi32>
    %cst_20 = arith.constant 0.000000e+00 : f32
    %99 = vector.broadcast %cst_20 : f32 to vector<16x1xf32>
    %100 = arith.cmpf ogt, %88, %99 : vector<16x1xf32>
    %101 = vector.broadcast %100 : vector<16x1xi1> to vector<16x128xi1>
    %102 = arith.andi %98, %101 : vector<16x128xi1>
    %cst_21 = arith.constant -1.000000e+00 : f32
    %103 = vector.broadcast %cst_21 : f32 to vector<16x128xf32>
    %104 = arith.select %102, %95, %103 : vector<16x128xi1>, vector<16x128xf32>
    %cst_22 = arith.constant dense<0xFF800000> : vector<128xf32>
    %105 = vector.multi_reduction <maximumf>, %104, %cst_22 [0] : vector<16x128xf32> to vector<128xf32>
    %106 = vector.shape_cast %105 : vector<128xf32> to vector<1x128xf32>
    %107 = tpu.iota {dimensions = array<i32: 0>} : vector<16x128xi32>
    %108 = vector.broadcast %106 : vector<1x128xf32> to vector<16x128xf32>
    %109 = arith.cmpf oeq, %104, %108 : vector<16x128xf32>
    %c16_i32 = arith.constant 16 : i32
    %110 = vector.broadcast %c16_i32 : i32 to vector<16x128xi32>
    %111 = arith.select %109, %107, %110 : vector<16x128xi1>, vector<16x128xi32>
    %cst_23 = arith.constant dense<2147483647> : vector<128xi32>
    %112 = vector.multi_reduction <minsi>, %111, %cst_23 [0] : vector<16x128xi32> to vector<128xi32>
    %113 = vector.shape_cast %112 : vector<128xi32> to vector<1x128xi32>
    %cst_24 = arith.constant 0.000000e+00 : f32
    %114 = vector.broadcast %cst_24 : f32 to vector<1x128xf32>
    %115 = arith.maximumf %106, %114 : vector<1x128xf32>
    %c0_25 = arith.constant 0 : index
    %c0_26 = arith.constant 0 : index
    %c0_27 = arith.constant 0 : index
    %116 = vector.load %arg3[%c0_25, %c0_26, %c0_27] : memref<1x1x128xf32, #tpu.memory_space<vmem>>, vector<1x1x128xf32>
    %117 = vector.shape_cast %116 : vector<1x1x128xf32> to vector<1x128xf32>
    %118 = vector.shape_cast %115 : vector<1x128xf32> to vector<1x1x128xf32>
    tpu.vector_store %arg3[%c0_25, %c0_26, %c0_27], %118 {strides = array<i32>} : memref<1x1x128xf32, #tpu.memory_space<vmem>>, vector<1x1x128xf32>,
    %c0_28 = arith.constant 0 : index
    %c0_29 = arith.constant 0 : index
    %c0_30 = arith.constant 0 : index
    %119 = vector.load %arg4[%c0_28, %c0_29, %c0_30] : memref<1x1x128xi32, #tpu.memory_space<vmem>>, vector<1x1x128xi32>
    %120 = vector.shape_cast %119 : vector<1x1x128xi32> to vector<1x128xi32>
    %121 = vector.shape_cast %113 : vector<1x128xi32> to vector<1x1x128xi32>
    tpu.vector_store %arg4[%c0_28, %c0_29, %c0_30], %121 {strides = array<i32>} : memref<1x1x128xi32, #tpu.memory_space<vmem>>, vector<1x1x128xi32>,
    %cst_31 = arith.constant 5.500000e-01 : f32
    %122 = vector.broadcast %cst_31 : f32 to vector<1x128xf32>
    %123 = arith.cmpf ogt, %115, %122 : vector<1x128xf32>
    %124 = arith.extui %123 : vector<1x128xi1> to vector<1x128xi32>
    %c0_32 = arith.constant 0 : index
    %c0_33 = arith.constant 0 : index
    %c0_34 = arith.constant 0 : index
    %125 = vector.load %arg5[%c0_32, %c0_33, %c0_34] : memref<1x1x128xi32, #tpu.memory_space<vmem>>, vector<1x1x128xi32>
    %126 = vector.shape_cast %125 : vector<1x1x128xi32> to vector<1x128xi32>
    %127 = vector.shape_cast %124 : vector<1x128xi32> to vector<1x1x128xi32>
    tpu.vector_store %arg5[%c0_32, %c0_33, %c0_34], %127 {strides = array<i32>} : memref<1x1x128xi32, #tpu.memory_space<vmem>>, vector<1x1x128xi32>,
    %cst_35 = arith.constant 7.500000e-01 : f32
    %128 = vector.broadcast %cst_35 : f32 to vector<1x128xf32>
    %129 = arith.cmpf ogt, %115, %128 : vector<1x128xf32>
    %cst_36 = arith.constant 2.500000e-01 : f32
    %130 = vector.broadcast %cst_36 : f32 to vector<1x128xf32>
    %131 = arith.cmpf olt, %115, %130 : vector<1x128xf32>
    %cst_37 = arith.constant dense<true> : vector<1x128xi1>
    %132 = arith.xori %129, %cst_37 : vector<1x128xi1>
    %cst_38 = arith.constant dense<true> : vector<1x128xi1>
    %133 = arith.xori %131, %cst_38 : vector<1x128xi1>
    %134 = arith.andi %132, %133 : vector<1x128xi1>
    %135 = arith.extui %129 : vector<1x128xi1> to vector<1x128xi32>
    %136 = arith.sitofp %135 : vector<1x128xi32> to vector<1x128xf32>
    %cst_39 = arith.constant 2.500000e-01 : f32
    %137 = vector.broadcast %cst_39 : f32 to vector<1x128xf32>
    %138 = arith.subf %115, %137 : vector<1x128xf32>
    %cst_40 = arith.constant 5.000000e-01 : f32
    %139 = vector.broadcast %cst_40 : f32 to vector<1x128xf32>
    %140 = arith.divf %138, %139 : vector<1x128xf32>
    %141 = arith.select %134, %140, %136 : vector<1x128xi1>, vector<1x128xf32>
    %c0_41 = arith.constant 0 : index
    %c0_42 = arith.constant 0 : index
    %c0_43 = arith.constant 0 : index
    %142 = vector.load %arg6[%c0_41, %c0_42, %c0_43] : memref<1x1x128xf32, #tpu.memory_space<vmem>>, vector<1x1x128xf32>
    %143 = vector.shape_cast %142 : vector<1x1x128xf32> to vector<1x128xf32>
    %144 = vector.shape_cast %141 : vector<1x128xf32> to vector<1x1x128xf32>
    tpu.vector_store %arg6[%c0_41, %c0_42, %c0_43], %144 {strides = array<i32>} : memref<1x1x128xf32, #tpu.memory_space<vmem>>, vector<1x1x128xf32>,
    return
  }
  func.func @transform_0(%arg0: i32) -> (i32, i32, i32) {
    %c0_i32 = arith.constant 0 : i32
    %c0_i32_0 = arith.constant 0 : i32
    %c0_i32_1 = arith.constant 0 : i32
    return %arg0, %c0_i32, %c0_i32_0 : i32, i32, i32
  }
  func.func @transform_1(%arg0: i32) -> (i32, i32, i32) {
    %c0_i32 = arith.constant 0 : i32
    %c0_i32_0 = arith.constant 0 : i32
    %c0_i32_1 = arith.constant 0 : i32
    return %arg0, %c0_i32, %c0_i32_0 : i32, i32, i32
  }
  func.func @transform_2(%arg0: i32) -> (i32, i32, i32) {
    %c0_i32 = arith.constant 0 : i32
    %c0_i32_0 = arith.constant 0 : i32
    %c0_i32_1 = arith.constant 0 : i32
    return %arg0, %c0_i32, %c0_i32_0 : i32, i32, i32
  }
  func.func @transform_3(%arg0: i32) -> (i32, i32, i32) {
    %c0_i32 = arith.constant 0 : i32
    %c0_i32_0 = arith.constant 0 : i32
    %c0_i32_1 = arith.constant 0 : i32
    return %arg0, %c0_i32, %c0_i32_0 : i32, i32, i32
  }
  func.func @transform_4(%arg0: i32) -> (i32, i32, i32) {
    %c0_i32 = arith.constant 0 : i32
    %c0_i32_0 = arith.constant 0 : i32
    %c0_i32_1 = arith.constant 0 : i32
    return %arg0, %c0_i32, %c0_i32_0 : i32, i32, i32
  }
  func.func @transform_5(%arg0: i32) -> (i32, i32, i32) {
    %c0_i32 = arith.constant 0 : i32
    %c0_i32_0 = arith.constant 0 : i32
    %c0_i32_1 = arith.constant 0 : i32
    return %arg0, %c0_i32, %c0_i32_0 : i32, i32, i32
  }
}

</mosaic_0001>

<llo_original>
// kernel: fwd.1
$region0: #{fwd.1}
  #allocation0 [shape = 'u32[]', space=smem, size = 0x4, offset = 0x4, fixed_abs, tag = 'smem constant byte address 0x4 - core index']
  #allocation1 [shape = 'u32[144,128]{1,0:T(1,128)}', space=vmem, size = 0x12000, scoped, tag = 'internal scratch']
  %s0 = inlined_call_operand.vmem [shape: f32[2,8,128], index: 0, kind: input, shape index: {}]
  %s1 = inlined_call_operand.vmem [shape: f32[2,16,8], index: 1, kind: input, shape index: {}]
  %s2 = inlined_call_operand.vmem [shape: f32[2,1,128], index: 2, kind: output, shape index: {0}]
  %s3 = inlined_call_operand.vmem [shape: s32[2,1,128], index: 3, kind: output, shape index: {1}]
  %s4 = inlined_call_operand.vmem [shape: s32[2,1,128], index: 4, kind: output, shape index: {2}]
  %s5 = inlined_call_operand.vmem [shape: f32[2,1,128], index: 5, kind: output, shape index: {3}]
  %6 = xla_tuple %s2, %s3, %s4, %s5
  %s7 = sld [smem:[#allocation0]]
  $region65: #{fwd.1} parent=0
    _
  %s9 = ssub.s32 1, %s7
  %s10 = scalar_select 0, %s9, %s7
  loop: start=0, step=1, limit=4
  $region2: #{fwd.1} parent=0 // loop_pre_header
    _
  $region3: #{fwd.1} parent=0 // loop_header
    %s12 = sphi 0, %s16
    %p13 = scmp.ge.s32.totalorder %s12, 4
    %s22 = sphi 0, %s24
    %s25 = sphi 0, %s22
    %s26 = sphi 0, %s25
    %s42 = sphi 0, %s26
    %s48 = sphi 0, %s50
    %s51 = sphi 0, %s48
    %s52 = sphi 0, %s51
    %s68 = sphi 0, %s52
    %s74 = sphi 0, %s76
    %s77 = sphi 0, %s74
    %s78 = sphi 0, %s77
    %s94 = sphi 0, %s78
    %s100 = sphi 0, %s102
    %s103 = sphi 0, %s100
    %s104 = sphi 0, %s103
    %s120 = sphi 0, %s104
    %s126 = sphi 0, %s128
    %s129 = sphi 0, %s126
    %s130 = sphi 0, %s129
    %s146 = sphi 0, %s130
    %s152 = sphi 0, %s154
    %s155 = sphi 0, %s152
    %s156 = sphi 0, %s155
    %s172 = sphi 0, %s156
  $region4: #{fwd.1} parent=0 // loop_header_branch
    %15 = sbr.rel (%p13) target = $region8
  $region5: #{fwd.1} parent=0 // loop_body
    %s17 = ssub.s32 %s12, 1
    %s18 = ssub.s32 %s12, 2
    %s19 = sadd.s32 %s12, 1
    %s20 = ssub.s32 %s12, %s19
    %p21 = scmp.eq.s32.totalorder %s20, 0
    %s23 = sadd.s32 %s22, 1
    %s24 = scalar_select %p21, %s22, %s23
    %p27 = pneg %p21
    %p28 = scmp.eq.s32.totalorder %s12, 1
    %p29 = por %p27, %p28
    %p30 = scmp.ne.s32.totalorder %s22, %s25
    %p31 = scmp.eq.s32.totalorder %s12, 0
    %p32 = por %p30, %p31
    %p33 = scmp.ne.s32.totalorder %s22, %s25
    %p34 = scmp.eq.s32.totalorder %s17, 1
    %p35 = por %p33, %p34
    %p36 = scmp.ne.s32.totalorder %s25, %s26
    %p37 = scmp.eq.s32.totalorder %s17, 0
    %p38 = por %p36, %p37
    %p39 = scmp.ne.s32.totalorder %s25, %s26
    %p40 = scmp.eq.s32.totalorder %s18, 1
    %p41 = por %p39, %p40
    %p43 = scmp.ne.s32.totalorder %s26, %s42
    %p44 = scmp.eq.s32.totalorder %s18, 0
    %p45 = por %p43, %p44
    %s46 = ssub.s32 %s12, %s19
    %p47 = scmp.eq.s32.totalorder %s46, 0
    %s49 = sadd.s32 %s48, 1
    %s50 = scalar_select %p47, %s48, %s49
    %p53 = pneg %p47
    %p54 = scmp.eq.s32.totalorder %s12, 1
    %p55 = por %p53, %p54
    %p56 = scmp.ne.s32.totalorder %s48, %s51
    %p57 = scmp.eq.s32.totalorder %s12, 0
    %p58 = por %p56, %p57
    %p59 = scmp.ne.s32.totalorder %s48, %s51
    %p60 = scmp.eq.s32.totalorder %s17, 1
    %p61 = por %p59, %p60
    %p62 = scmp.ne.s32.totalorder %s51, %s52
    %p63 = scmp.eq.s32.totalorder %s17, 0
    %p64 = por %p62, %p63
    %p65 = scmp.ne.s32.totalorder %s51, %s52
    %p66 = scmp.eq.s32.totalorder %s18, 1
    %p67 = por %p65, %p66
    %p69 = scmp.ne.s32.totalorder %s52, %s68
    %p70 = scmp.eq.s32.totalorder %s18, 0
    %p71 = por %p69, %p70
    %s72 = ssub.s32 %s12, %s19
    %p73 = scmp.eq.s32.totalorder %s72, 0
    %s75 = sadd.s32 %s74, 1
    %s76 = scalar_select %p73, %s74, %s75
    %p79 = pneg %p73
    %p80 = scmp.eq.s32.totalorder %s12, 1
    %p81 = por %p79, %p80
    %p82 = scmp.ne.s32.totalorder %s74, %s77
    %p83 = scmp.eq.s32.totalorder %s12, 0
    %p84 = por %p82, %p83
    %p85 = scmp.ne.s32.totalorder %s74, %s77
    %p86 = scmp.eq.s32.totalorder %s17, 1
    %p87 = por %p85, %p86
    %p88 = scmp.ne.s32.totalorder %s77, %s78
    %p89 = scmp.eq.s32.totalorder %s17, 0
    %p90 = por %p88, %p89
    %p91 = scmp.ne.s32.totalorder %s77, %s78
    %p92 = scmp.eq.s32.totalorder %s18, 1
    %p93 = por %p91, %p92
    %p95 = scmp.ne.s32.totalorder %s78, %s94
    %p96 = scmp.eq.s32.totalorder %s18, 0
    %p97 = por %p95, %p96
    %s98 = ssub.s32 %s12, %s19
    %p99 = scmp.eq.s32.totalorder %s98, 0
    %s101 = sadd.s32 %s100, 1
    %s102 = scalar_select %p99, %s100, %s101
    %p105 = pneg %p99
    %p106 = scmp.eq.s32.totalorder %s12, 1
    %p107 = por %p105, %p106
    %p108 = scmp.ne.s32.totalorder %s100, %s103
    %p109 = scmp.eq.s32.totalorder %s12, 0
    %p110 = por %p108, %p109
    %p111 = scmp.ne.s32.totalorder %s100, %s103
    %p112 = scmp.eq.s32.totalorder %s17, 1
    %p113 = por %p111, %p112
    %p114 = scmp.ne.s32.totalorder %s103, %s104
    %p115 = scmp.eq.s32.totalorder %s17, 0
    %p116 = por %p114, %p115
    %p117 = scmp.ne.s32.totalorder %s103, %s104
    %p118 = scmp.eq.s32.totalorder %s18, 1
    %p119 = por %p117, %p118
    %p121 = scmp.ne.s32.totalorder %s104, %s120
    %p122 = scmp.eq.s32.totalorder %s18, 0
    %p123 = por %p121, %p122
    %s124 = ssub.s32 %s12, %s19
    %p125 = scmp.eq.s32.totalorder %s124, 0
    %s127 = sadd.s32 %s126, 1
    %s128 = scalar_select %p125, %s126, %s127
    %p131 = pneg %p125
    %p132 = scmp.eq.s32.totalorder %s12, 1
    %p133 = por %p131, %p132
    %p134 = scmp.ne.s32.totalorder %s126, %s129
    %p135 = scmp.eq.s32.totalorder %s12, 0
    %p136 = por %p134, %p135
    %p137 = scmp.ne.s32.totalorder %s126, %s129
    %p138 = scmp.eq.s32.totalorder %s17, 1
    %p139 = por %p137, %p138
    %p140 = scmp.ne.s32.totalorder %s129, %s130
    %p141 = scmp.eq.s32.totalorder %s17, 0
    %p142 = por %p140, %p141
    %p143 = scmp.ne.s32.totalorder %s129, %s130
    %p144 = scmp.eq.s32.totalorder %s18, 1
    %p145 = por %p143, %p144
    %p147 = scmp.ne.s32.totalorder %s130, %s146
    %p148 = scmp.eq.s32.totalorder %s18, 0
    %p149 = por %p147, %p148
    %s150 = ssub.s32 %s12, %s19
    %p151 = scmp.eq.s32.totalorder %s150, 0
    %s153 = sadd.s32 %s152, 1
    %s154 = scalar_select %p151, %s152, %s153
    %p157 = pneg %p151
    %p158 = scmp.eq.s32.totalorder %s12, 1
    %p159 = por %p157, %p158
    %p160 = scmp.ne.s32.totalorder %s152, %s155
    %p161 = scmp.eq.s32.totalorder %s12, 0
    %p162 = por %p160, %p161
    %p163 = scmp.ne.s32.totalorder %s152, %s155
    %p164 = scmp.eq.s32.totalorder %s17, 1
    %p165 = por %p163, %p164
    %p166 = scmp.ne.s32.totalorder %s155, %s156
    %p167 = scmp.eq.s32.totalorder %s17, 0
    %p168 = por %p166, %p167
    %p169 = scmp.ne.s32.totalorder %s155, %s156
    %p170 = scmp.eq.s32.totalorder %s18, 1
    %p171 = por %p169, %p170
    %p173 = scmp.ne.s32.totalorder %s156, %s172
    %p174 = scmp.eq.s32.totalorder %s18, 0
    %p175 = por %p173, %p174
    %p176 = scmp.le.s32.totalorder 1, %s12
    %p177 = scmp.lt.s32.totalorder %s12, 3
    %p178 = pnand %p176, %p177
    %p179 = pneg %p178
    // Predicated region
    $region9: #{fwd.1} parent=5 // pred_check
      _
    $region10: #{fwd.1} parent=5 // pred_check_branch
      %181 = sbr.rel (%p178) target = $region12
    $region11: #{fwd.1} parent=5 // pred_region
      %s182 = ssub.s32 %s12, 1
    $region12: #{fwd.1} parent=5 // pred_fallthru
      _
    %p183 = scmp.lt.s32.totalorder %s12, 2
    // Predicated region
    $region13: #{fwd.1} parent=5 // pred_check
      %p184 = pneg %p183
    $region14: #{fwd.1} parent=5 // pred_check_branch
      %186 = sbr.rel (%p184) target = $region16
    $region15: #{fwd.1} parent=5 // pred_region
      // Predicated region
      $region17: #{fwd.1} parent=15 // pred_check
        %p187 = pneg %p32
      $region18: #{fwd.1} parent=15 // pred_check_branch
        %189 = sbr.rel (%p187) target = $region20
      $region19: #{fwd.1} parent=15 // pred_region
        %p190 = scmp.lt.s32.totalorder %s12, 1
        %s191 = scalar_select %p190, %s12, 1
        %s192 = smul.addr %s191, 8
        %s193 = scalar_lea.vmem %s0, %s192
      $region20: #{fwd.1} parent=15 // pred_fallthru
        _
      // Predicated region
      $region21: #{fwd.1} parent=15 // pred_check
        %p194 = pneg %p58
      $region22: #{fwd.1} parent=15 // pred_check_branch
        %196 = sbr.rel (%p194) target = $region24
      $region23: #{fwd.1} parent=15 // pred_region
        %p197 = scmp.lt.s32.totalorder %s12, 1
        %s198 = scalar_select %p197, %s12, 1
        %s199 = smul.addr %s198, 2
        %s200 = smul.addr %s199, 8
        %s201 = scalar_lea.vmem %s1, %s200
      $region24: #{fwd.1} parent=15 // pred_fallthru
        _
    $region16: #{fwd.1} parent=5 // pred_fallthru
      _
    %p202 = scmp.le.s32.totalorder 1, %s12
    %p203 = scmp.lt.s32.totalorder %s12, 3
    %p204 = pnand %p202, %p203
    %p205 = pneg %p204
    // Predicated region
    $region25: #{fwd.1} parent=5 // pred_check
      _
    $region26: #{fwd.1} parent=5 // pred_check_branch
      %207 = sbr.rel (%p204) target = $region28
    $region27: #{fwd.1} parent=5 // pred_region
      %s208 = ssub.s32 %s12, 1
      %p209 = scmp.lt.s32.totalorder %s17, 1
      %s210 = scalar_select %p209, %s17, 1
      %s211 = smul.addr %s210, 8
      %s212 = scalar_lea.vmem %s0, %s211
      %p213 = pneg %p38
      %p214 = pneg %p35
      %p215 = scmp.lt.s32.totalorder %s17, 1
      %s216 = scalar_select %p215, %s17, 1
      %s217 = smul.addr %s216, 2
      %s218 = smul.addr %s217, 8
      %s219 = scalar_lea.vmem %s1, %s218
      %p220 = pneg %p64
      %p221 = pneg %p61
      %p222 = pneg %p90
      %p223 = pneg %p87
      %p224 = scmp.lt.s32.totalorder %s17, 1
      %s225 = scalar_select %p224, %s17, 1
      %s226 = scalar_lea.vmem %s2, %s225
      %p227 = pneg %p116
      %p228 = pneg %p113
      %p229 = scmp.lt.s32.totalorder %s17, 1
      %s230 = scalar_select %p229, %s17, 1
      %s231 = scalar_lea.vmem %s3, %s230
      %p232 = pneg %p142
      %p233 = pneg %p139
      %p234 = scmp.lt.s32.totalorder %s17, 1
      %s235 = scalar_select %p234, %s17, 1
      %s236 = scalar_lea.vmem %s4, %s235
      %p237 = pneg %p168
      %p238 = pneg %p165
      %p239 = scmp.lt.s32.totalorder %s17, 1
      %s240 = scalar_select %p239, %s17, 1
      %s241 = scalar_lea.vmem %s5, %s240
      %p242 = scmp.lt.s32.totalorder %s17, 1
      %s243 = scalar_select %p242, %s17, 1
      %s244 = smul.addr %s243, 8
      %s245 = scalar_lea.vmem %s0, %s244
      %p246 = scmp.lt.s32.totalorder %s17, 1
      %s247 = scalar_select %p246, %s17, 1
      %s248 = smul.addr %s247, 2
      %s249 = smul.addr %s248, 8
      %s250 = scalar_lea.vmem %s1, %s249
      %p251 = scmp.lt.s32.totalorder %s17, 1
      %s252 = scalar_select %p251, %s17, 1
      %s253 = scalar_lea.vmem %s2, %s252
      %p254 = scmp.lt.s32.totalorder %s17, 1
      %s255 = scalar_select %p254, %s17, 1
      %s256 = scalar_lea.vmem %s3, %s255
      %p257 = scmp.lt.s32.totalorder %s17, 1
      %s258 = scalar_select %p257, %s17, 1
      %s259 = scalar_lea.vmem %s4, %s258
      %p260 = scmp.lt.s32.totalorder %s17, 1
      %s261 = scalar_select %p260, %s17, 1
      %s262 = scalar_lea.vmem %s5, %s261
      %v263 = vld [vmem:[%s245] sm:$0xff]
      %v264 = vld [vmem:[%s250] sm:$0xff]
      %v265 = vld [vmem:[%s250 + $0x8] sm:$0xff]
      %v266 = vcvt.f32.s32.to.zero.pseudo %v263
      %v267 = vcvt.f32.s32.to.zero.pseudo %v264
      %v268 = vcvt.f32.s32.to.zero.pseudo %v265
      %v269 = vmul.f32 %v263, 0.5
      %v271 = vrot.slane %v269, 3
      %v273 = vadd.f32 %v263, %v271
      %v274 = vmul.f32 %v264, 0.5
      %v275 = vmul.f32 %v265, 0.5
      %278 = vrot.lane.b32.xlu0 %v274, 125
      %v279 = vpop.permute.xlu0 %278
      %280 = vrot.lane.b32.xlu0 %v275, 125
      %v281 = vpop.permute.xlu0 %280
      %v284 = vadd.f32 %v264, %v279
      %v285 = vadd.f32 %v265, %v281
      %v286 = vlaneseq
      %v287 = vshrl.u32 %v286, 7
      %v288 = vsub.s32 0, %v287
      %v289 = vrot.slane %v273, %v288
      %291 = vset.pattern.permute.xlu0 0
      %292 = vperm.xlu0 %291, %v284
      %v293 = vpop.permute.xlu0 %292
      %296 = vset.pattern.permute.xlu0 0
      %297 = vperm.xlu0 %296, %v285
      %v298 = vpop.permute.xlu0 %297
      %v300 = vmin.f32 %v289, %v293
      %v301 = vmin.f32 %v289, %v298
      %v302 = vsub.f32 %v263, %v271
      %v303 = vsub.f32 %v264, %v279
      %v304 = vsub.f32 %v265, %v281
      %v305 = vlaneseq
      %v306 = vshrl.u32 %v305, 7
      %v307 = vsub.s32 0, %v306
      %v308 = vrot.slane %v302, %v307
      %310 = vset.pattern.permute.xlu0 0
      %311 = vperm.xlu0 %310, %v303
      %v312 = vpop.permute.xlu0 %311
      %315 = vset.pattern.permute.xlu0 0
      %316 = vperm.xlu0 %315, %v304
      %v317 = vpop.permute.xlu0 %316
      %v319 = vmax.f32 %v308, %v312
      %v320 = vmax.f32 %v308, %v317
      %v321 = vsub.f32 %v300, %v319
      %v322 = vsub.f32 %v301, %v320
      %v323 = vmax.f32 %v321, 0.0
      %v324 = vmax.f32 %v322, 0.0
      %v325 = vlaneseq
      %v326 = vshrl.u32 %v325, 7
      %v327 = vsub.s32 1, %v326
      %v328 = vrot.slane %v273, %v327
      %329 = vset.pattern.permute.xlu0 1
      %330 = vperm.xlu0 %329, %v284
      %v331 = vpop.permute.xlu0 %330
      %333 = vset.pattern.permute.xlu0 1
      %334 = vperm.xlu0 %333, %v285
      %v335 = vpop.permute.xlu0 %334
      %v337 = vmin.f32 %v328, %v331
      %v338 = vmin.f32 %v328, %v335
      %v339 = vlaneseq
      %v340 = vshrl.u32 %v339, 7
      %v341 = vsub.s32 1, %v340
      %v342 = vrot.slane %v302, %v341
      %343 = vset.pattern.permute.xlu0 1
      %344 = vperm.xlu0 %343, %v303
      %v345 = vpop.permute.xlu0 %344
      %347 = vset.pattern.permute.xlu0 1
      %348 = vperm.xlu0 %347, %v304
      %v349 = vpop.permute.xlu0 %348
      %v351 = vmax.f32 %v342, %v345
      %v352 = vmax.f32 %v342, %v349
      %v353 = vsub.f32 %v337, %v351
      %v354 = vsub.f32 %v338, %v352
      %v355 = vmax.f32 %v353, 0.0
      %v356 = vmax.f32 %v354, 0.0
      %v357 = vlaneseq
      %v358 = vshrl.u32 %v357, 7
      %v359 = vsub.s32 2, %v358
      %v360 = vrot.slane %v273, %v359
      %361 = vset.pattern.permute.xlu0 2
      %362 = vperm.xlu0 %361, %v284
      %v363 = vpop.permute.xlu0 %362
      %365 = vset.pattern.permute.xlu0 2
      %366 = vperm.xlu0 %365, %v285
      %v367 = vpop.permute.xlu0 %366
      %v369 = vmin.f32 %v360, %v363
      %v370 = vmin.f32 %v360, %v367
      %v371 = vlaneseq
      %v372 = vshrl.u32 %v371, 7
      %v373 = vsub.s32 2, %v372
      %v374 = vrot.slane %v302, %v373
      %375 = vset.pattern.permute.xlu0 2
      %376 = vperm.xlu0 %375, %v303
      %v377 = vpop.permute.xlu0 %376
      %379 = vset.pattern.permute.xlu0 2
      %380 = vperm.xlu0 %379, %v304
      %v381 = vpop.permute.xlu0 %380
      %v383 = vmax.f32 %v374, %v377
      %v384 = vmax.f32 %v374, %v381
      %v385 = vsub.f32 %v369, %v383
      %v386 = vsub.f32 %v370, %v384
      %v387 = vmax.f32 %v385, 0.0
      %v388 = vmax.f32 %v386, 0.0
      %v389 = vmul.f32 %v323, %v355
      %v390 = vmul.f32 %v324, %v356
      %v391 = vmul.f32 %v389, %v387
      %v392 = vmul.f32 %v390, %v388
      %v394 = vrot.slane %v263, 1
      %v396 = vmul.f32 %v263, %v394
      %v397 = vrot.slane %v263, 2
      %v399 = vmul.f32 %v396, %v397
      %402 = vrot.lane.b32.xlu0 %v264, 127
      %v403 = vpop.permute.xlu0 %402
      %404 = vrot.lane.b32.xlu0 %v265, 127
      %v405 = vpop.permute.xlu0 %404
      %v408 = vmul.f32 %v264, %v403
      %v409 = vmul.f32 %v265, %v405
      %410 = vrot.lane.b32.xlu0 %v264, 126
      %v411 = vpop.permute.xlu0 %410
      %412 = vrot.lane.b32.xlu0 %v265, 126
      %v413 = vpop.permute.xlu0 %412
      %v416 = vmul.f32 %v408, %v411
      %v417 = vmul.f32 %v409, %v413
      %v418 = vlaneseq
      %v419 = vshrl.u32 %v418, 7
      %v420 = vsub.s32 3, %v419
      %v421 = vrot.slane %v399, %v420
      %423 = vset.pattern.permute.xlu0 3
      %424 = vperm.xlu0 %423, %v416
      %v425 = vpop.permute.xlu0 %424
      %428 = vset.pattern.permute.xlu0 3
      %429 = vperm.xlu0 %428, %v417
      %v430 = vpop.permute.xlu0 %429
      %v432 = vadd.f32 %v421, %v425
      %v433 = vadd.f32 %v421, %v430
      %v434 = vsub.f32 %v432, %v391
      %v435 = vsub.f32 %v433, %v392
      %v436 = vmax.f32 %v434, 1e-06
      %v437 = vmax.f32 %v435, 1e-06
      %v438 = vrcp.pop %v436
      %v439 = vmul.f32 %v391, %v438
      %v440 = vrcp.pop %v437
      %v441 = vmul.f32 %v392, %v440
      %442 = vset.pattern.permute.xlu0 7
      %443 = vperm.xlu0 %442, %v267
      %v444 = vpop.permute.xlu0 %443
      %445 = vset.pattern.permute.xlu0 7
      %446 = vperm.xlu0 %445, %v268
      %v447 = vpop.permute.xlu0 %446
      %v448 = vlaneseq
      %v449 = vshrl.u32 %v448, 7
      %v450 = vsub.s32 7, %v449
      %v451 = vrot.slane %v266, %v450
      %vm452 = vcmp.eq.s32.totalorder %v444, %v451
      %vm453 = vcmp.eq.s32.totalorder %v447, %v451
      %vm454 = vcmp.gt.f32.partialorder %v416, 0.0
      %vm455 = vcmp.gt.f32.partialorder %v417, 0.0
      %v456 = vsel %vm454, 1, 0
      %v457 = vsel %vm455, 1, 0
      %458 = vset.pattern.permute.xlu0 3
      %459 = vperm.xlu0 %458, %v456
      %v460 = vpop.permute.xlu0 %459
      %461 = vset.pattern.permute.xlu0 3
      %462 = vperm.xlu0 %461, %v457
      %v463 = vpop.permute.xlu0 %462
      %vm464 = vcmp.eq.s32.totalorder %v460, 1
      %vm465 = vcmp.eq.s32.totalorder %v463, 1
      %vm466 = vmand %vm452, %vm464
      %vm467 = vmand %vm453, %vm465
      %v468 = vsel %vm466, %v439, -1.0
      %v469 = vsel %vm467, %v441, -1.0
      %v470 = vmax.f32 %v468, %v469
      %v471 = vrot.slane %v470, 4
      %v472 = vmax.f32 %v470, %v471
      %v473 = vrot.slane %v472, 2
      %v474 = vmax.f32 %v472, %v473
      %v475 = vrot.slane %v474, 1
      %v476 = vmax.f32 %v474, %v475
      %v477 = vlaneseq
      %v478 = vshrl.u32 %v477, 7
      %v479 = vadd.s32 %v478, 8
      %vm480 = vcmp.eq.f32.partialorder %v468, %v476
      %vm481 = vcmp.eq.f32.partialorder %v469, %v476
      %v482 = vsel %vm480, %v478, 16
      %v483 = vsel %vm481, %v479, 16
      %vm484 = vcmp.lt.s32.totalorder %v482, %v483
      %v485 = vsel %vm484, %v482, %v483
      %v486 = vrot.slane %v485, 4
      %vm487 = vcmp.lt.s32.totalorder %v485, %v486
      %v488 = vsel %vm487, %v485, %v486
      %v489 = vrot.slane %v488, 2
      %vm490 = vcmp.lt.s32.totalorder %v488, %v489
      %v491 = vsel %vm490, %v488, %v489
      %v492 = vrot.slane %v491, 1
      %vm493 = vcmp.lt.s32.totalorder %v491, %v492
      %v494 = vsel %vm493, %v491, %v492
      %v495 = vmax.f32 %v476, 0.0
      %496 = vst [vmem:[%s253] sm:$0x1] %v495
      %497 = vst [vmem:[%s256] sm:$0x1] %v494
      %vm498 = vcmp.gt.f32.partialorder %v495, 0.55
      %v499 = vsel %vm498, 1, 0
      %500 = vst [vmem:[%s259] sm:$0x1] %v499
      %vm501 = vcmp.gt.f32.partialorder %v495, 0.75
      %vm502 = vcmp.lt.f32.partialorder %v495, 0.25
      %vm503 = vmxor %vm501, 1
      %vm504 = vmxor %vm502, 1
      %vm505 = vmand %vm503, %vm504
      %v506 = vsel %vm501, 1, 0
      %v507 = vcvt.s32.f32 %v506
      %v508 = vsub.f32 %v495, 0.25
      %v509 = vrcp.pop 0.5
      %v510 = vmul.f32 %v508, %v509
      %v511 = vsel %vm505, %v510, %v507
      %512 = vst [vmem:[%s262] sm:$0x1] %v511
      %p513 = scmp.lt.s32.totalorder %s17, 1
      %s514 = scalar_select %p513, %s17, 1
      %s515 = scalar_lea.vmem %s2, %s514
      %p516 = scmp.lt.s32.totalorder %s17, 1
      %s517 = scalar_select %p516, %s17, 1
      %s518 = scalar_lea.vmem %s3, %s517
      %p519 = scmp.lt.s32.totalorder %s17, 1
      %s520 = scalar_select %p519, %s17, 1
      %s521 = scalar_lea.vmem %s4, %s520
      %p522 = scmp.lt.s32.totalorder %s17, 1
      %s523 = scalar_select %p522, %s17, 1
      %s524 = scalar_lea.vmem %s5, %s523
      // Predicated region
      $region29: #{fwd.1} parent=27 // pred_check
        %p525 = pneg %p87
      $region30: #{fwd.1} parent=27 // pred_check_branch
        %527 = sbr.rel (%p525) target = $region32
      $region31: #{fwd.1} parent=27 // pred_region
        _
      $region32: #{fwd.1} parent=27 // pred_fallthru
        _
      // Predicated region
      $region33: #{fwd.1} parent=27 // pred_check
        %p528 = pneg %p113
      $region34: #{fwd.1} parent=27 // pred_check_branch
        %530 = sbr.rel (%p528) target = $region36
      $region35: #{fwd.1} parent=27 // pred_region
        _
      $region36: #{fwd.1} parent=27 // pred_fallthru
        _
      // Predicated region
      $region37: #{fwd.1} parent=27 // pred_check
        %p531 = pneg %p139
      $region38: #{fwd.1} parent=27 // pred_check_branch
        %533 = sbr.rel (%p531) target = $region40
      $region39: #{fwd.1} parent=27 // pred_region
        _
      $region40: #{fwd.1} parent=27 // pred_fallthru
        _
      // Predicated region
      $region41: #{fwd.1} parent=27 // pred_check
        %p534 = pneg %p165
      $region42: #{fwd.1} parent=27 // pred_check_branch
        %536 = sbr.rel (%p534) target = $region44
      $region43: #{fwd.1} parent=27 // pred_region
        _
      $region44: #{fwd.1} parent=27 // pred_fallthru
        _
    $region28: #{fwd.1} parent=5 // pred_fallthru
      _
    %p537 = scmp.le.s32.totalorder 2, %s12
    // Predicated region
    $region45: #{fwd.1} parent=5 // pred_check
      %p538 = pneg %p537
    $region46: #{fwd.1} parent=5 // pred_check_branch
      %540 = sbr.rel (%p538) target = $region48
    $region47: #{fwd.1} parent=5 // pred_region
      %s541 = ssub.s32 %s12, 2
      // Predicated region
      $region49: #{fwd.1} parent=47 // pred_check
        %p542 = pneg %p93
      $region50: #{fwd.1} parent=47 // pred_check_branch
        %544 = sbr.rel (%p542) target = $region52
      $region51: #{fwd.1} parent=47 // pred_region
        %p545 = scmp.lt.s32.totalorder %s18, 1
        %s546 = scalar_select %p545, %s18, 1
        %s547 = scalar_lea.vmem %s2, %s546
      $region52: #{fwd.1} parent=47 // pred_fallthru
        _
      // Predicated region
      $region53: #{fwd.1} parent=47 // pred_check
        %p548 = pneg %p119
      $region54: #{fwd.1} parent=47 // pred_check_branch
        %550 = sbr.rel (%p548) target = $region56
      $region55: #{fwd.1} parent=47 // pred_region
        %p551 = scmp.lt.s32.totalorder %s18, 1
        %s552 = scalar_select %p551, %s18, 1
        %s553 = scalar_lea.vmem %s3, %s552
      $region56: #{fwd.1} parent=47 // pred_fallthru
        _
      // Predicated region
      $region57: #{fwd.1} parent=47 // pred_check
        %p554 = pneg %p145
      $region58: #{fwd.1} parent=47 // pred_check_branch
        %556 = sbr.rel (%p554) target = $region60
      $region59: #{fwd.1} parent=47 // pred_region
        %p557 = scmp.lt.s32.totalorder %s18, 1
        %s558 = scalar_select %p557, %s18, 1
        %s559 = scalar_lea.vmem %s4, %s558
      $region60: #{fwd.1} parent=47 // pred_fallthru
        _
      // Predicated region
      $region61: #{fwd.1} parent=47 // pred_check
        %p560 = pneg %p171
      $region62: #{fwd.1} parent=47 // pred_check_branch
        %562 = sbr.rel (%p560) target = $region64
      $region63: #{fwd.1} parent=47 // pred_region
        %p563 = scmp.lt.s32.totalorder %s18, 1
        %s564 = scalar_select %p563, %s18, 1
        %s565 = scalar_lea.vmem %s5, %s564
      $region64: #{fwd.1} parent=47 // pred_fallthru
        _
    $region48: #{fwd.1} parent=5 // pred_fallthru
      _
  $region6: #{fwd.1} parent=0 // loop_footer
    %s16 = sadd.s32 1, %s12
  $region7: #{fwd.1} parent=0 // loop_footer_branch
    %11 = sbr.rel target = $region3
  $region8: #{fwd.1} parent=0 // loop_exit
    _

</llo_original>
